<compile_context>
chip_gen: v5e
topology: v5e:2x2
jax: 0.10.0
libtpu: 0.0.40
codegen_flags: <defaults>
</compile_context>

<pallas_src>
import jax
import jax.numpy as jnp
from jax.experimental import pallas as pl
from jax.experimental.pallas import tpu as pltpu


def _round_up(a: int, b: int) -> int:
    return (a + b - 1) // b * b


def _choose_tile(total: int, tile_max: int, granule: int, min_blocks: int) -> int:
    """Largest tile <= tile_max that is either the full extent or a multiple of
    `granule`, while producing at least `min_blocks` blocks when possible."""
    t = min(tile_max, total)
    if min_blocks > 1:
        t = min(t, pl.cdiv(total, min_blocks))
    if t >= total:
        return total
    t = max(granule, (t // granule) * granule)
    return total if t >= total else t


# ----------------------------------------------------------------------------
# Pallas kernel: fused permute + Linear for one (batch, frame-tile) block.
# ----------------------------------------------------------------------------
def input_process_kernel(x_ref, w_ref, b_ref, o_ref):
    # x_ref: (nfeats, TF, njoints)   native-layout input tile (permute fused here)
    # w_ref: (nfeats, njoints, Np)   weight regrouped per feature channel
    # b_ref: (1, Np)                 bias (f32)
    # o_ref: (TF, Np)
    #
    # out[f, n] = sum_c sum_j x[c, f, j] * w[c, j, n]   (+ bias)
    # Static (unrolled) loop over the tiny `nfeats` axis; each term is one MXU
    # matmul.  f32 accumulation regardless of operand dtype.
    nfeats = x_ref.shape[0]
    acc = jnp.dot(x_ref[0], w_ref[0], preferred_element_type=jnp.float32)
    for c in range(1, nfeats):
        acc = acc + jnp.dot(x_ref[c], w_ref[c], preferred_element_type=jnp.float32)
    o_ref[...] = (acc + b_ref[...]).astype(o_ref.dtype)


# ----------------------------------------------------------------------------
# Wrapper: weight regrouping / lane padding (tiny) + pallas_call.
# ----------------------------------------------------------------------------
def input_process(x, weight, bias, *, tf=1024,
                  compute_dtype=jnp.float32, out_dtype=jnp.float32):
    """x: [bs, nfeats, nframes, njoints] (native PyTorch layout, NOT permuted).
    weight: [latent_dim, input_feats], bias: [latent_dim].
    Returns [bs, nframes, latent_dim]."""
    bs, nfeats, nframes, njoints = x.shape
    N, K = weight.shape
    assert K == njoints * nfeats, (K, njoints, nfeats)

    # Regroup weight so the (j, c) contraction can be done per feature channel
    # inside the kernel:  w2[c, j, n] = weight[n, j*nfeats + c]
    w2 = weight.reshape(N, njoints, nfeats).transpose(2, 1, 0)   # (nfeats, njoints, N)
    w2 = w2.astype(compute_dtype)
    b2 = bias.reshape(1, N).astype(jnp.float32)

    # Lane-dense output: pad latent dim up to a 128-lane multiple (weight/bias
    # are tiny; padded columns are zero and sliced off after the call).
    Np = _round_up(N, 128)
    if Np != N:
        w2 = jnp.pad(w2, ((0, 0), (0, 0), (0, Np - N)))
        b2 = jnp.pad(b2, ((0, 0), (0, Np - N)))

    xk = x.astype(compute_dtype)   # no transpose / no row padding in HBM

    # Frame tile: big (amortize per-step overhead), sublane-granular (8 for
    # f32, 16 for bf16), and enough total grid steps (>= ~4) so the "parallel"
    # axes can shard across both v7x TensorCores.
    granule = 16 if jnp.dtype(compute_dtype).itemsize == 2 else 8
    min_frame_blocks = max(1, pl.cdiv(4, bs))
    TF = _choose_tile(nframes, tf, granule, min_frame_blocks)
    grid = (bs, pl.cdiv(nframes, TF))

    out = pl.pallas_call(
        input_process_kernel,
        grid=grid,
        in_specs=[
            # x in native layout; the permute is absorbed by this BlockSpec +
            # the in-kernel per-channel contraction.
            pl.BlockSpec((None, nfeats, TF, njoints), lambda b, f: (b, 0, f, 0)),
            # weight / bias: constant block index -> stay resident in VMEM.
            pl.BlockSpec((nfeats, njoints, Np), lambda b, f: (0, 0, 0)),
            pl.BlockSpec((1, Np), lambda b, f: (0, 0)),
        ],
        out_specs=pl.BlockSpec((None, TF, Np), lambda b, f: (b, f, 0)),
        out_shape=jax.ShapeDtypeStruct((bs, nframes, Np), out_dtype),
        compiler_params=pltpu.CompilerParams(
            dimension_semantics=("parallel", "parallel")),
    )(xk, w2, b2)

    if Np != N:
        out = out[..., :N]
    return out


# ----------------------------------------------------------------------------
# Pure-JAX reference (mirrors the PyTorch forward literally) for validation.
# ----------------------------------------------------------------------------
def input_process_ref(x, weight, bias):
    bs, nfeats, nframes, njoints = x.shape
    xr = jnp.transpose(x, (0, 2, 3, 1)).reshape(bs, nframes, njoints * nfeats)
    return jnp.einsum('bfk,nk->bfn', xr, weight) + bias[None, None, :]


if __name__ == "__main__":
    # Small shapes consistent with the module (motion-diffusion style).
    bs, nfeats, nframes, njoints = 2, 6, 16, 22
    input_feats = njoints * nfeats            # 132
    latent_dim = 64                           # exercises the N -> 128 lane pad

    key = jax.random.PRNGKey(0)
    k0, k1, k2 = jax.random.split(key, 3)

    x = jax.random.normal(k0, (bs, nfeats, nframes, njoints), jnp.float32)
    # nn.Linear(input_feats, latent_dim): weight [latent_dim, input_feats], bias [latent_dim]
    weight = jax.random.normal(k1, (latent_dim, input_feats), jnp.float32) * 0.05
    bias = jax.random.normal(k2, (latent_dim,), jnp.float32) * 0.05

    ref = jax.block_until_ready(input_process_ref(x, weight, bias))

    # Exact-parity f32 path.
    out = jax.block_until_ready(input_process(x, weight, bias))
    assert out.shape == (bs, nframes, latent_dim), out.shape
    assert jnp.allclose(out, ref, atol=1e-5, rtol=1e-5), (
        float(jnp.max(jnp.abs(out - ref))))

    # Bandwidth-optimized bf16-operand path (f32 accumulation) — loose tolerance.
    out_bf16 = jax.block_until_ready(
        input_process(x, weight, bias, compute_dtype=jnp.bfloat16))
    assert out_bf16.shape == (bs, nframes, latent_dim), out_bf16.shape
    bf16_err = float(jnp.max(jnp.abs(out_bf16 - ref)))
    assert bf16_err < 5e-2, bf16_err

    print("KERNEL_OK")
</pallas_src>

<mosaic_0001>
module attributes {stable_mosaic.version = 11 : i64} {
  func.func @input_process_kernel(%arg0: i32, %arg1: i32, %arg2: memref<1x6x8x22xf32, #tpu.memory_space<vmem>>, %arg3: memref<6x22x128xf32, #tpu.memory_space<vmem>>, %arg4: memref<1x128xf32, #tpu.memory_space<vmem>>, %arg5: memref<1x8x128xf32, #tpu.memory_space<vmem>>) attributes {dimension_semantics = [#tpu.dimension_semantics<parallel>, #tpu.dimension_semantics<parallel>], iteration_bounds = array<i64: 2, 2>, scalar_prefetch = 0 : i64, scratch_operands = 0 : i64, tpu.core_type = #tpu.core_type<tc>, window_params = [{transform_indices = @transform_0, window_bounds = array<i64: 1, 6, 8, 22>}, {pipeline_mode = #tpu.pipeline_mode<synchronous>, transform_indices = @transform_1, window_bounds = array<i64: 6, 22, 128>}, {pipeline_mode = #tpu.pipeline_mode<synchronous>, transform_indices = @transform_2, window_bounds = array<i64: 1, 128>}, {transform_indices = @transform_3, window_bounds = array<i64: 1, 8, 128>}]} {
    %c0 = arith.constant 0 : index
    %c0_0 = arith.constant 0 : index
    %c0_1 = arith.constant 0 : index
    %c0_2 = arith.constant 0 : index
    %0 = vector.load %arg2[%c0, %c0_0, %c0_1, %c0_2] : memref<1x6x8x22xf32, #tpu.memory_space<vmem>>, vector<1x1x8x22xf32>
    %1 = vector.shape_cast %0 : vector<1x1x8x22xf32> to vector<8x22xf32>
    %c0_3 = arith.constant 0 : index
    %c0_4 = arith.constant 0 : index
    %c0_5 = arith.constant 0 : index
    %2 = vector.load %arg3[%c0_3, %c0_4, %c0_5] : memref<6x22x128xf32, #tpu.memory_space<vmem>>, vector<1x22x128xf32>
    %3 = vector.shape_cast %2 : vector<1x22x128xf32> to vector<22x128xf32>
    %cst = arith.constant dense<0.000000e+00> : vector<8x128xf32>
    %4 = tpu.matmul %1, %3, %cst {dimension_numbers = #tpu.dot_dimension_numbers<[1], [0], [0], [1], [0, 0, 1, 1], [], []>} : vector<8x22xf32>, vector<22x128xf32>, vector<8x128xf32> -> vector<8x128xf32>
    %c0_6 = arith.constant 0 : index
    %c1 = arith.constant 1 : index
    %c0_7 = arith.constant 0 : index
    %c0_8 = arith.constant 0 : index
    %5 = vector.load %arg2[%c0_6, %c1, %c0_7, %c0_8] : memref<1x6x8x22xf32, #tpu.memory_space<vmem>>, vector<1x1x8x22xf32>
    %6 = vector.shape_cast %5 : vector<1x1x8x22xf32> to vector<8x22xf32>
    %c1_9 = arith.constant 1 : index
    %c0_10 = arith.constant 0 : index
    %c0_11 = arith.constant 0 : index
    %7 = vector.load %arg3[%c1_9, %c0_10, %c0_11] : memref<6x22x128xf32, #tpu.memory_space<vmem>>, vector<1x22x128xf32>
    %8 = vector.shape_cast %7 : vector<1x22x128xf32> to vector<22x128xf32>
    %cst_12 = arith.constant dense<0.000000e+00> : vector<8x128xf32>
    %9 = tpu.matmul %6, %8, %cst_12 {dimension_numbers = #tpu.dot_dimension_numbers<[1], [0], [0], [1], [0, 0, 1, 1], [], []>} : vector<8x22xf32>, vector<22x128xf32>, vector<8x128xf32> -> vector<8x128xf32>
    %10 = arith.addf %4, %9 : vector<8x128xf32>
    %c0_13 = arith.constant 0 : index
    %c2 = arith.constant 2 : index
    %c0_14 = arith.constant 0 : index
    %c0_15 = arith.constant 0 : index
    %11 = vector.load %arg2[%c0_13, %c2, %c0_14, %c0_15] : memref<1x6x8x22xf32, #tpu.memory_space<vmem>>, vector<1x1x8x22xf32>
    %12 = vector.shape_cast %11 : vector<1x1x8x22xf32> to vector<8x22xf32>
    %c2_16 = arith.constant 2 : index
    %c0_17 = arith.constant 0 : index
    %c0_18 = arith.constant 0 : index
    %13 = vector.load %arg3[%c2_16, %c0_17, %c0_18] : memref<6x22x128xf32, #tpu.memory_space<vmem>>, vector<1x22x128xf32>
    %14 = vector.shape_cast %13 : vector<1x22x128xf32> to vector<22x128xf32>
    %cst_19 = arith.constant dense<0.000000e+00> : vector<8x128xf32>
    %15 = tpu.matmul %12, %14, %cst_19 {dimension_numbers = #tpu.dot_dimension_numbers<[1], [0], [0], [1], [0, 0, 1, 1], [], []>} : vector<8x22xf32>, vector<22x128xf32>, vector<8x128xf32> -> vector<8x128xf32>
    %16 = arith.addf %10, %15 : vector<8x128xf32>
    %c0_20 = arith.constant 0 : index
    %c3 = arith.constant 3 : index
    %c0_21 = arith.constant 0 : index
    %c0_22 = arith.constant 0 : index
    %17 = vector.load %arg2[%c0_20, %c3, %c0_21, %c0_22] : memref<1x6x8x22xf32, #tpu.memory_space<vmem>>, vector<1x1x8x22xf32>
    %18 = vector.shape_cast %17 : vector<1x1x8x22xf32> to vector<8x22xf32>
    %c3_23 = arith.constant 3 : index
    %c0_24 = arith.constant 0 : index
    %c0_25 = arith.constant 0 : index
    %19 = vector.load %arg3[%c3_23, %c0_24, %c0_25] : memref<6x22x128xf32, #tpu.memory_space<vmem>>, vector<1x22x128xf32>
    %20 = vector.shape_cast %19 : vector<1x22x128xf32> to vector<22x128xf32>
    %cst_26 = arith.constant dense<0.000000e+00> : vector<8x128xf32>
    %21 = tpu.matmul %18, %20, %cst_26 {dimension_numbers = #tpu.dot_dimension_numbers<[1], [0], [0], [1], [0, 0, 1, 1], [], []>} : vector<8x22xf32>, vector<22x128xf32>, vector<8x128xf32> -> vector<8x128xf32>
    %22 = arith.addf %16, %21 : vector<8x128xf32>
    %c0_27 = arith.constant 0 : index
    %c4 = arith.constant 4 : index
    %c0_28 = arith.constant 0 : index
    %c0_29 = arith.constant 0 : index
    %23 = vector.load %arg2[%c0_27, %c4, %c0_28, %c0_29] : memref<1x6x8x22xf32, #tpu.memory_space<vmem>>, vector<1x1x8x22xf32>
    %24 = vector.shape_cast %23 : vector<1x1x8x22xf32> to vector<8x22xf32>
    %c4_30 = arith.constant 4 : index
    %c0_31 = arith.constant 0 : index
    %c0_32 = arith.constant 0 : index
    %25 = vector.load %arg3[%c4_30, %c0_31, %c0_32] : memref<6x22x128xf32, #tpu.memory_space<vmem>>, vector<1x22x128xf32>
    %26 = vector.shape_cast %25 : vector<1x22x128xf32> to vector<22x128xf32>
    %cst_33 = arith.constant dense<0.000000e+00> : vector<8x128xf32>
    %27 = tpu.matmul %24, %26, %cst_33 {dimension_numbers = #tpu.dot_dimension_numbers<[1], [0], [0], [1], [0, 0, 1, 1], [], []>} : vector<8x22xf32>, vector<22x128xf32>, vector<8x128xf32> -> vector<8x128xf32>
    %28 = arith.addf %22, %27 : vector<8x128xf32>
    %c0_34 = arith.constant 0 : index
    %c5 = arith.constant 5 : index
    %c0_35 = arith.constant 0 : index
    %c0_36 = arith.constant 0 : index
    %29 = vector.load %arg2[%c0_34, %c5, %c0_35, %c0_36] : memref<1x6x8x22xf32, #tpu.memory_space<vmem>>, vector<1x1x8x22xf32>
    %30 = vector.shape_cast %29 : vector<1x1x8x22xf32> to vector<8x22xf32>
    %c5_37 = arith.constant 5 : index
    %c0_38 = arith.constant 0 : index
    %c0_39 = arith.constant 0 : index
    %31 = vector.load %arg3[%c5_37, %c0_38, %c0_39] : memref<6x22x128xf32, #tpu.memory_space<vmem>>, vector<1x22x128xf32>
    %32 = vector.shape_cast %31 : vector<1x22x128xf32> to vector<22x128xf32>
    %cst_40 = arith.constant dense<0.000000e+00> : vector<8x128xf32>
    %33 = tpu.matmul %30, %32, %cst_40 {dimension_numbers = #tpu.dot_dimension_numbers<[1], [0], [0], [1], [0, 0, 1, 1], [], []>} : vector<8x22xf32>, vector<22x128xf32>, vector<8x128xf32> -> vector<8x128xf32>
    %34 = arith.addf %28, %33 : vector<8x128xf32>
    %c0_41 = arith.constant 0 : index
    %c0_42 = arith.constant 0 : index
    %35 = vector.load %arg4[%c0_41, %c0_42] : memref<1x128xf32, #tpu.memory_space<vmem>>, vector<1x128xf32>
    %36 = vector.broadcast %35 : vector<1x128xf32> to vector<8x128xf32>
    %37 = arith.addf %34, %36 : vector<8x128xf32>
    %c0_43 = arith.constant 0 : index
    %c0_44 = arith.constant 0 : index
    %c0_45 = arith.constant 0 : index
    %38 = vector.load %arg5[%c0_43, %c0_44, %c0_45] : memref<1x8x128xf32, #tpu.memory_space<vmem>>, vector<1x8x128xf32>
    %39 = vector.shape_cast %38 : vector<1x8x128xf32> to vector<8x128xf32>
    %40 = vector.shape_cast %37 : vector<8x128xf32> to vector<1x8x128xf32>
    tpu.vector_store %arg5[%c0_43, %c0_44, %c0_45], %40 {strides = array<i32>} : memref<1x8x128xf32, #tpu.memory_space<vmem>>, vector<1x8x128xf32>,
    return
  }
  func.func @transform_0(%arg0: i32, %arg1: i32) -> (i32, i32, i32, i32) {
    %c0_i32 = arith.constant 0 : i32
    %c0_i32_0 = arith.constant 0 : i32
    %c0_i32_1 = arith.constant 0 : i32
    return %arg0, %c0_i32, %arg1, %c0_i32_0 : i32, i32, i32, i32
  }
  func.func @transform_1(%arg0: i32, %arg1: i32) -> (i32, i32, i32) {
    %c0_i32 = arith.constant 0 : i32
    %c0_i32_0 = arith.constant 0 : i32
    %c0_i32_1 = arith.constant 0 : i32
    %c0_i32_2 = arith.constant 0 : i32
    return %c0_i32, %c0_i32_0, %c0_i32_1 : i32, i32, i32
  }
  func.func @transform_2(%arg0: i32, %arg1: i32) -> (i32, i32) {
    %c0_i32 = arith.constant 0 : i32
    %c0_i32_0 = arith.constant 0 : i32
    %c0_i32_1 = arith.constant 0 : i32
    return %c0_i32, %c0_i32_0 : i32, i32
  }
  func.func @transform_3(%arg0: i32, %arg1: i32) -> (i32, i32, i32) {
    %c0_i32 = arith.constant 0 : i32
    %c0_i32_0 = arith.constant 0 : i32
    return %arg0, %arg1, %c0_i32 : i32, i32, i32
  }
}

</mosaic_0001>

<llo_original>
// kernel: tpu_custom_call.1
$region0: #{tpu_custom_call.1}
  #allocation0 [shape = 'u32[]', space=smem, size = 0x4, offset = 0x4, fixed_abs, tag = 'smem constant byte address 0x4 - core index']
  #allocation1 [shape = 'u32[72,128]{1,0:T(1,128)}', space=vmem, size = 0x9000, scoped, tag = 'internal scratch']
  %s0 = inlined_call_operand.hbm [shape: f32[2,6,16,22], index: 0, kind: input, shape index: {}]
  %s1 = inlined_call_operand.hbm [shape: f32[6,22,128], index: 1, kind: input, shape index: {}]
  %s2 = inlined_call_operand.vmem [shape: f32[1,128], index: 2, kind: input, shape index: {}]
  %s3 = inlined_call_operand.hbm [shape: f32[2,16,128], index: 3, kind: output, shape index: {}]
  %s4 = sld [smem:[#allocation0]]
  $region53: #{tpu_custom_call.1} parent=0
    _
  %s6 = ssub.s32 1, %s4
  %s7 = scalar_select 0, %s6, %s4
  $region1: #{tpu_custom_call.1} parent=0
    #allocation2 [shape = 'u8[49152]{0}', space=vmem, size = 0xc000, scoped, tag = 'input window, operand 0']
    #allocation3 [shape = 's32[2]{0}', space=sflag, size = 0x8, scoped, tag = 'scoped memory for tpu_custom_call.1']
    #allocation4 [shape = 's32[2]{0}', space=sflag, size = 0x8, scoped, tag = 'scoped memory for tpu_custom_call.1']
    #allocation5 [shape = 'u8[73728]{0}', space=vmem, size = 0x12000, scoped, tag = 'input window, operand 1, single buffered']
    #allocation6 [shape = 's32[1]{0}', space=sflag, size = 0x4, scoped, tag = 'scoped memory for tpu_custom_call.1']
    #allocation7 [shape = 'u8[8192]{0}', space=vmem, size = 0x2000, scoped, tag = 'output window, operand 0']
    %8 = vsyncpa [#allocation3], 0
    %s9 = scalar_lea.sflag [#allocation3], 1
    %10 = vsyncpa %s9, 0
    %11 = vsyncpa [#allocation6], 0
    %12 = vsyncpa [#allocation4], 0
    %s13 = scalar_lea.sflag [#allocation4], 1
    %14 = vsyncpa %s13, 0
    loop: start=0, step=1, limit=6
    $region2: #{tpu_custom_call.1} parent=1 // loop_pre_header
      _
    $region3: #{tpu_custom_call.1} parent=1 // loop_header
      %s16 = sphi 0, %s20
      %p17 = scmp.ge.s32.totalorder %s16, 6
      %s23 = sphi 0, %s35
      %s24 = sphi 0, %s31
      %s25 = sphi 0, %s23
      %s26 = sphi 0, %s24
      %s27 = sphi 0, %s25
      %s28 = sphi 0, %s26
      %s40 = sphi 0, %s42
      %s43 = sphi 0, %s40
      %s44 = sphi 0, %s43
      %s60 = sphi 0, %s44
      %s64 = sphi 0, %s64
      %s66 = sphi 0, %s64
      %s67 = sphi 0, %s66
      %s81 = sphi 0, %s67
      %s85 = sphi 0, %s85
      %s87 = sphi 0, %s85
      %s88 = sphi 0, %s87
      %s102 = sphi 0, %s88
      %s110 = sphi 0, %s112
      %s113 = sphi 0, %s110
      %s114 = sphi 0, %s113
      %s130 = sphi 0, %s114
    $region4: #{tpu_custom_call.1} parent=1 // loop_header_branch
      %19 = sbr.rel (%p17) target = $region8
    $region5: #{tpu_custom_call.1} parent=1 // loop_body
      %s21 = ssub.s32 %s16, 1
      %s22 = ssub.s32 %s16, 2
      %s29 = sadd.s32 1, %s24
      %p30 = scmp.ge.s32.totalorder %s29, 2
      %s31 = scalar_select %p30, 0, %s29
      %s32 = sadd.s32 1, %s23
      %s33 = scalar_select %p30, %s32, %s23
      %p34 = scmp.ge.s32.totalorder %s33, 2
      %s35 = scalar_select %p34, 0, %s33
      %s36 = ssub.s32 %s23, %s35
      %s37 = ssub.s32 %s24, %s31
      %s38 = sor.u32 %s36, %s37
      %p39 = scmp.eq.s32.totalorder %s38, 0
      %s41 = sadd.s32 %s40, 1
      %s42 = scalar_select %p39, %s40, %s41
      %p45 = pneg %p39
      %p46 = scmp.eq.s32.totalorder %s16, 3
      %p47 = por %p45, %p46
      %p48 = scmp.ne.s32.totalorder %s40, %s43
      %p49 = scmp.eq.s32.totalorder %s16, 0
      %p50 = por %p48, %p49
      %p51 = scmp.ne.s32.totalorder %s40, %s43
      %p52 = scmp.eq.s32.totalorder %s21, 3
      %p53 = por %p51, %p52
      %p54 = scmp.ne.s32.totalorder %s43, %s44
      %p55 = scmp.eq.s32.totalorder %s21, 0
      %p56 = por %p54, %p55
      %p57 = scmp.ne.s32.totalorder %s43, %s44
      %p58 = scmp.eq.s32.totalorder %s22, 3
      %p59 = por %p57, %p58
      %p61 = scmp.ne.s32.totalorder %s44, %s60
      %p62 = scmp.eq.s32.totalorder %s22, 0
      %p63 = por %p61, %p62
      %s65 = sadd.s32 %s64, 1
      %p68 = scmp.eq.s32.totalorder %s16, 3
      %p69 = scmp.ne.s32.totalorder %s64, %s66
      %p70 = scmp.eq.s32.totalorder %s16, 0
      %p71 = por %p69, %p70
      %p72 = scmp.ne.s32.totalorder %s64, %s66
      %p73 = scmp.eq.s32.totalorder %s21, 3
      %p74 = por %p72, %p73
      %p75 = scmp.ne.s32.totalorder %s66, %s67
      %p76 = scmp.eq.s32.totalorder %s21, 0
      %p77 = por %p75, %p76
      %p78 = scmp.ne.s32.totalorder %s66, %s67
      %p79 = scmp.eq.s32.totalorder %s22, 3
      %p80 = por %p78, %p79
      %p82 = scmp.ne.s32.totalorder %s67, %s81
      %p83 = scmp.eq.s32.totalorder %s22, 0
      %p84 = por %p82, %p83
      %s86 = sadd.s32 %s85, 1
      %p89 = scmp.eq.s32.totalorder %s16, 3
      %p90 = scmp.ne.s32.totalorder %s85, %s87
      %p91 = scmp.eq.s32.totalorder %s16, 0
      %p92 = por %p90, %p91
      %p93 = scmp.ne.s32.totalorder %s85, %s87
      %p94 = scmp.eq.s32.totalorder %s21, 3
      %p95 = por %p93, %p94
      %p96 = scmp.ne.s32.totalorder %s87, %s88
      %p97 = scmp.eq.s32.totalorder %s21, 0
      %p98 = por %p96, %p97
      %p99 = scmp.ne.s32.totalorder %s87, %s88
      %p100 = scmp.eq.s32.totalorder %s22, 3
      %p101 = por %p99, %p100
      %p103 = scmp.ne.s32.totalorder %s88, %s102
      %p104 = scmp.eq.s32.totalorder %s22, 0
      %p105 = por %p103, %p104
      %s106 = ssub.s32 %s23, %s35
      %s107 = ssub.s32 %s24, %s31
      %s108 = sor.u32 %s106, %s107
      %p109 = scmp.eq.s32.totalorder %s108, 0
      %s111 = sadd.s32 %s110, 1
      %s112 = scalar_select %p109, %s110, %s111
      %p115 = pneg %p109
      %p116 = scmp.eq.s32.totalorder %s16, 3
      %p117 = por %p115, %p116
      %p118 = scmp.ne.s32.totalorder %s110, %s113
      %p119 = scmp.eq.s32.totalorder %s16, 0
      %p120 = por %p118, %p119
      %p121 = scmp.ne.s32.totalorder %s110, %s113
      %p122 = scmp.eq.s32.totalorder %s21, 3
      %p123 = por %p121, %p122
      %p124 = scmp.ne.s32.totalorder %s113, %s114
      %p125 = scmp.eq.s32.totalorder %s21, 0
      %p126 = por %p124, %p125
      %p127 = scmp.ne.s32.totalorder %s113, %s114
      %p128 = scmp.eq.s32.totalorder %s22, 3
      %p129 = por %p127, %p128
      %p131 = scmp.ne.s32.totalorder %s114, %s130
      %p132 = scmp.eq.s32.totalorder %s22, 0
      %p133 = por %p131, %p132
      %p134 = scmp.le.s32.totalorder 1, %s16
      %p135 = scmp.lt.s32.totalorder %s16, 5
      %p136 = pnand %p134, %p135
      %p137 = pneg %p136
      // Predicated region
      $region9: #{tpu_custom_call.1} parent=5 // pred_check
        _
      $region10: #{tpu_custom_call.1} parent=5 // pred_check_branch
        %139 = sbr.rel (%p136) target = $region12
      $region11: #{tpu_custom_call.1} parent=5 // pred_region
        %s140 = ssub.s32 %s16, 1
        // Predicated region
        $region13: #{tpu_custom_call.1} parent=11 // pred_check
          %p141 = pneg %p77
        $region14: #{tpu_custom_call.1} parent=11 // pred_check_branch
          %143 = sbr.rel (%p141) target = $region16
        $region15: #{tpu_custom_call.1} parent=11 // pred_region
          %145 = vsyncadd [#allocation6], 0
          %s146 = sshll.u32 %s1, 4
          %s147 = int_to_ptr.hbm [resolvable:$true] %s146
          %s148 = sshll.u32 [#allocation5], 4
          %s149 = int_to_ptr.vmem [resolvable:$true] %s148
          %154 = dma.hbm_to_vmem [thread:$0]  %s147, 2304, %s149, [#allocation6], 128, 128, 8
        $region16: #{tpu_custom_call.1} parent=11 // pred_fallthru
          _
        // Predicated region
        $region17: #{tpu_custom_call.1} parent=11 // pred_check
          %p155 = pneg %p98
        $region18: #{tpu_custom_call.1} parent=11 // pred_check_branch
          %157 = sbr.rel (%p155) target = $region20
        $region19: #{tpu_custom_call.1} parent=11 // pred_region
          _
        $region20: #{tpu_custom_call.1} parent=11 // pred_fallthru
          _
      $region12: #{tpu_custom_call.1} parent=5 // pred_fallthru
        _
      %p158 = scmp.lt.s32.totalorder %s16, 4
      // Predicated region
      $region21: #{tpu_custom_call.1} parent=5 // pred_check
        %p159 = pneg %p158
      $region22: #{tpu_custom_call.1} parent=5 // pred_check_branch
        %161 = sbr.rel (%p159) target = $region24
      $region23: #{tpu_custom_call.1} parent=5 // pred_region
        // Predicated region
        $region25: #{tpu_custom_call.1} parent=23 // pred_check
          %p162 = pneg %p50
        $region26: #{tpu_custom_call.1} parent=23 // pred_check_branch
          %164 = sbr.rel (%p162) target = $region28
        $region27: #{tpu_custom_call.1} parent=23 // pred_region
          %s165 = sand.u32 %s40, 1
          %s166 = scalar_lea.sflag [#allocation3], %s165
          %s167 = sand.u32 %s40, 1
          %s168 = smul.addr %s167, 48
          %s169 = scalar_lea.vmem [#allocation2], %s168
          %171 = vsyncadd %s166, 0
          %s172 = smul.addr %s23, 12
          %s173 = sadd.s32 %s24, %s172
          %s174 = smul.addr %s173, 8
          %s175 = scalar_lea.hbm %s0, %s174
          %s176 = sshll.u32 %s175, 4
          %s177 = int_to_ptr.hbm [resolvable:$true] %s176
          %s178 = sshll.u32 %s169, 4
          %s179 = int_to_ptr.vmem [resolvable:$true] %s178
          %184 = dma.hbm_to_vmem [thread:$0]  %s177, 768, %s179, %s166, 256, 128, 8
        $region28: #{tpu_custom_call.1} parent=23 // pred_fallthru
          _
      $region24: #{tpu_custom_call.1} parent=5 // pred_fallthru
        _
      %p185 = scmp.le.s32.totalorder 1, %s16
      %p186 = scmp.lt.s32.totalorder %s16, 5
      %p187 = pnand %p185, %p186
      %p188 = pneg %p187
      // Predicated region
      $region29: #{tpu_custom_call.1} parent=5 // pred_check
        _
      $region30: #{tpu_custom_call.1} parent=5 // pred_check_branch
        %190 = sbr.rel (%p187) target = $region32
      $region31: #{tpu_custom_call.1} parent=5 // pred_region
        %s191 = ssub.s32 %s16, 1
        %s192 = sand.u32 %s43, 1
        %s193 = scalar_lea.sflag [#allocation3], %s192
        %s194 = sand.u32 %s43, 1
        %s195 = smul.addr %s194, 48
        %s196 = scalar_lea.vmem [#allocation2], %s195
        // Predicated region
        $region33: #{tpu_custom_call.1} parent=31 // pred_check
          %p197 = pneg %p56
        $region34: #{tpu_custom_call.1} parent=31 // pred_check_branch
          %199 = sbr.rel (%p197) target = $region36
        $region35: #{tpu_custom_call.1} parent=31 // pred_region
          %201 = dma.done %s193, 768
        $region36: #{tpu_custom_call.1} parent=31 // pred_fallthru
          _
        // Predicated region
        $region37: #{tpu_custom_call.1} parent=31 // pred_check
          %p202 = pneg %p77
        $region38: #{tpu_custom_call.1} parent=31 // pred_check_branch
          %204 = sbr.rel (%p202) target = $region40
        $region39: #{tpu_custom_call.1} parent=31 // pred_region
          %206 = dma.done [#allocation6], 2304
        $region40: #{tpu_custom_call.1} parent=31 // pred_fallthru
          _
        %s207 = sand.u32 %s43, 1
        %s208 = scalar_lea.sflag [#allocation3], %s207
        %s209 = sand.u32 %s43, 1
        %s210 = smul.addr %s209, 48
        %s211 = scalar_lea.vmem [#allocation2], %s210
        %p212 = pneg %p56
        %p213 = pneg %p53
        %p214 = pneg %p77
        %p215 = pneg %p74
        %p216 = pneg %p98
        %p217 = pneg %p95
        %p218 = pneg %p126
        %p219 = pneg %p123
        %s220 = sand.u32 %s113, 1
        %s221 = scalar_lea.sflag [#allocation4], %s220
        %s222 = sand.u32 %s113, 1
        %s223 = smul.addr %s222, 8
        %s224 = scalar_lea.vmem [#allocation7], %s223
        %v225 = vld [vmem:[%s196] sm:$0xff]
        %v226 = vld [vmem:[#allocation5] sm:$0xff]
        %v227 = vld [vmem:[#allocation5 + $0x8] sm:$0xff]
        %v228 = vld [vmem:[#allocation5 + $0x10] sm:$0x3f]
        %s229 = scalar_lea.vmem %s196, 8 [#allocation2]
        %v230 = vld [vmem:[%s229] sm:$0xff]
        %s231 = scalar_lea.vmem [#allocation5], 24
        %v232 = vld [vmem:[%s231] sm:$0xff]
        %v233 = vld [vmem:[%s231 + $0x8] sm:$0xff]
        %v234 = vld [vmem:[%s231 + $0x10] sm:$0x3f]
        %vm235 = vcmask 179200
        %v237 = vsel %vm235, %v230, 0
        %vm239 = vcmask 1045504
        %v241 = vsel %vm239, %v234, 0
        %243 = vmatpush.msra.mxu0 0.0
        %244 = vmatpush.msra.mxu0 0.0
        %245 = vmatpush.msra.mxu0 0.0
        %246 = vmatpush.msra.mxu0 0.0
        %247 = vmatpush.msra.mxu0 0.0
        %248 = vmatpush.msra.mxu0 0.0
        %249 = vmatpush.msra.mxu0 0.0
        %250 = vmatpush.msra.mxu0 0.0
        %251 = vmatpush.msra.mxu0 0.0
        %252 = vmatpush.msra.mxu0 0.0
        %253 = vmatpush.msra.mxu0 0.0
        %254 = vmatpush.msra.mxu0 0.0
        %255 = vmatpush.msra.mxu0 0.0
        %256 = vmatpush.msra.mxu0 %v241
        %257 = vmatpush.msra.mxu0 %v233
        %258 = vmatpush.msra.mxu0 %v232
        %259 = vmatmul.f32.gmra.mxu0 %v237
        %v260 = vpop.f32.mrf.mxu0
        %v261 = vadd.f32 0.0, %v260
        %262 = vdwg.mxu0
        %v264 = vsel %vm235, %v225, 0
        %v267 = vsel %vm239, %v228, 0
        %269 = vmatpush.msra.mxu0 0.0
        %270 = vmatpush.msra.mxu0 0.0
        %271 = vmatpush.msra.mxu0 0.0
        %272 = vmatpush.msra.mxu0 0.0
        %273 = vmatpush.msra.mxu0 0.0
        %274 = vmatpush.msra.mxu0 0.0
        %275 = vmatpush.msra.mxu0 0.0
        %276 = vmatpush.msra.mxu0 0.0
        %277 = vmatpush.msra.mxu0 0.0
        %278 = vmatpush.msra.mxu0 0.0
        %279 = vmatpush.msra.mxu0 0.0
        %280 = vmatpush.msra.mxu0 0.0
        %281 = vmatpush.msra.mxu0 0.0
        %282 = vmatpush.msra.mxu0 %v267
        %283 = vmatpush.msra.mxu0 %v227
        %284 = vmatpush.msra.mxu0 %v226
        %285 = vmatmul.f32.gmra.mxu0 %v264
        %v286 = vpop.f32.mrf.mxu0
        %v287 = vadd.f32 %v261, %v286
        %288 = vdwg.mxu0
        %s289 = scalar_lea.vmem %s196, 16 [#allocation2]
        %v290 = vld [vmem:[%s289] sm:$0xff]
        %s291 = scalar_lea.vmem [#allocation5], 48
        %v292 = vld [vmem:[%s291] sm:$0xff]
        %v293 = vld [vmem:[%s291 + $0x8] sm:$0xff]
        %v294 = vld [vmem:[%s291 + $0x10] sm:$0x3f]
        %v296 = vsel %vm235, %v290, 0
        %v299 = vsel %vm239, %v294, 0
        %301 = vmatpush.msra.mxu0 0.0
        %302 = vmatpush.msra.mxu0 0.0
        %303 = vmatpush.msra.mxu0 0.0
        %304 = vmatpush.msra.mxu0 0.0
        %305 = vmatpush.msra.mxu0 0.0
        %306 = vmatpush.msra.mxu0 0.0
        %307 = vmatpush.msra.mxu0 0.0
        %308 = vmatpush.msra.mxu0 0.0
        %309 = vmatpush.msra.mxu0 0.0
        %310 = vmatpush.msra.mxu0 0.0
        %311 = vmatpush.msra.mxu0 0.0
        %312 = vmatpush.msra.mxu0 0.0
        %313 = vmatpush.msra.mxu0 0.0
        %314 = vmatpush.msra.mxu0 %v299
        %315 = vmatpush.msra.mxu0 %v293
        %316 = vmatpush.msra.mxu0 %v292
        %317 = vmatmul.f32.gmra.mxu0 %v296
        %v318 = vpop.f32.mrf.mxu0
        %v319 = vadd.f32 0.0, %v318
        %320 = vdwg.mxu0
        %v321 = vadd.f32 %v287, %v319
        %s322 = scalar_lea.vmem %s196, 24 [#allocation2]
        %v323 = vld [vmem:[%s322] sm:$0xff]
        %s324 = scalar_lea.vmem [#allocation5], 72
        %v325 = vld [vmem:[%s324] sm:$0xff]
        %v326 = vld [vmem:[%s324 + $0x8] sm:$0xff]
        %v327 = vld [vmem:[%s324 + $0x10] sm:$0x3f]
        %v329 = vsel %vm235, %v323, 0
        %v332 = vsel %vm239, %v327, 0
        %334 = vmatpush.msra.mxu0 0.0
        %335 = vmatpush.msra.mxu0 0.0
        %336 = vmatpush.msra.mxu0 0.0
        %337 = vmatpush.msra.mxu0 0.0
        %338 = vmatpush.msra.mxu0 0.0
        %339 = vmatpush.msra.mxu0 0.0
        %340 = vmatpush.msra.mxu0 0.0
        %341 = vmatpush.msra.mxu0 0.0
        %342 = vmatpush.msra.mxu0 0.0
        %343 = vmatpush.msra.mxu0 0.0
        %344 = vmatpush.msra.mxu0 0.0
        %345 = vmatpush.msra.mxu0 0.0
        %346 = vmatpush.msra.mxu0 0.0
        %347 = vmatpush.msra.mxu0 %v332
        %348 = vmatpush.msra.mxu0 %v326
        %349 = vmatpush.msra.mxu0 %v325
        %350 = vmatmul.f32.gmra.mxu0 %v329
        %v351 = vpop.f32.mrf.mxu0
        %v352 = vadd.f32 0.0, %v351
        %353 = vdwg.mxu0
        %v354 = vadd.f32 %v321, %v352
        %s355 = scalar_lea.vmem %s196, 32 [#allocation2]
        %v356 = vld [vmem:[%s355] sm:$0xff]
        %s357 = scalar_lea.vmem [#allocation5], 96
        %v358 = vld [vmem:[%s357] sm:$0xff]
        %v359 = vld [vmem:[%s357 + $0x8] sm:$0xff]
        %v360 = vld [vmem:[%s357 + $0x10] sm:$0x3f]
        %v362 = vsel %vm235, %v356, 0
        %v365 = vsel %vm239, %v360, 0
        %367 = vmatpush.msra.mxu0 0.0
        %368 = vmatpush.msra.mxu0 0.0
        %369 = vmatpush.msra.mxu0 0.0
        %370 = vmatpush.msra.mxu0 0.0
        %371 = vmatpush.msra.mxu0 0.0
        %372 = vmatpush.msra.mxu0 0.0
        %373 = vmatpush.msra.mxu0 0.0
        %374 = vmatpush.msra.mxu0 0.0
        %375 = vmatpush.msra.mxu0 0.0
        %376 = vmatpush.msra.mxu0 0.0
        %377 = vmatpush.msra.mxu0 0.0
        %378 = vmatpush.msra.mxu0 0.0
        %379 = vmatpush.msra.mxu0 0.0
        %380 = vmatpush.msra.mxu0 %v365
        %381 = vmatpush.msra.mxu0 %v359
        %382 = vmatpush.msra.mxu0 %v358
        %383 = vmatmul.f32.gmra.mxu0 %v362
        %v384 = vpop.f32.mrf.mxu0
        %v385 = vadd.f32 0.0, %v384
        %386 = vdwg.mxu0
        %v387 = vadd.f32 %v354, %v385
        %s388 = scalar_lea.vmem %s196, 40 [#allocation2]
        %v389 = vld [vmem:[%s388] sm:$0xff]
        %s390 = scalar_lea.vmem [#allocation5], 120
        %v391 = vld [vmem:[%s390] sm:$0xff]
        %v392 = vld [vmem:[%s390 + $0x8] sm:$0xff]
        %v393 = vld [vmem:[%s390 + $0x10] sm:$0x3f]
        %v395 = vsel %vm235, %v389, 0
        %v398 = vsel %vm239, %v393, 0
        %400 = vmatpush.msra.mxu0 0.0
        %401 = vmatpush.msra.mxu0 0.0
        %402 = vmatpush.msra.mxu0 0.0
        %403 = vmatpush.msra.mxu0 0.0
        %404 = vmatpush.msra.mxu0 0.0
        %405 = vmatpush.msra.mxu0 0.0
        %406 = vmatpush.msra.mxu0 0.0
        %407 = vmatpush.msra.mxu0 0.0
        %408 = vmatpush.msra.mxu0 0.0
        %409 = vmatpush.msra.mxu0 0.0
        %410 = vmatpush.msra.mxu0 0.0
        %411 = vmatpush.msra.mxu0 0.0
        %412 = vmatpush.msra.mxu0 0.0
        %413 = vmatpush.msra.mxu0 %v398
        %414 = vmatpush.msra.mxu0 %v392
        %415 = vmatpush.msra.mxu0 %v391
        %416 = vmatmul.f32.gmra.mxu0 %v395
        %v417 = vpop.f32.mrf.mxu0
        %v418 = vadd.f32 0.0, %v417
        %419 = vdwg.mxu0
        %v420 = vadd.f32 %v387, %v418
        %v421 = vld [vmem:[%s2] sm:$0x1]
        %v423 = vperm.slane %v421, 0
        %v425 = vadd.f32 %v420, %v423
        %426 = vst [vmem:[%s224] sm:$0xff] %v425
        %s427 = sand.u32 %s113, 1
        %s428 = scalar_lea.sflag [#allocation4], %s427
        %s429 = sand.u32 %s113, 1
        %s430 = smul.addr %s429, 8
        %s431 = scalar_lea.vmem [#allocation7], %s430
        // Predicated region
        $region41: #{tpu_custom_call.1} parent=31 // pred_check
          %p432 = pneg %p123
        $region42: #{tpu_custom_call.1} parent=31 // pred_check_branch
          %434 = sbr.rel (%p432) target = $region44
        $region43: #{tpu_custom_call.1} parent=31 // pred_region
          %436 = vsyncadd %s428, 0
          %s437 = smul.addr %s25, 2
          %s438 = sadd.s32 %s26, %s437
          %s439 = smul.addr %s438, 8
          %s440 = scalar_lea.hbm %s3, %s439
          %s442 = sshll.u32 %s431, 4
          %s443 = int_to_ptr.vmem [resolvable:$true] %s442
          %s444 = sshll.u32 %s440, 4
          %s445 = int_to_ptr.hbm [resolvable:$true] %s444
          %447 = dma.vmem_to_hbm [thread:$0]  %s443, 128, %s445, %s428
        $region44: #{tpu_custom_call.1} parent=31 // pred_fallthru
          _
      $region32: #{tpu_custom_call.1} parent=5 // pred_fallthru
        _
      %p448 = scmp.le.s32.totalorder 2, %s16
      // Predicated region
      $region45: #{tpu_custom_call.1} parent=5 // pred_check
        %p449 = pneg %p448
      $region46: #{tpu_custom_call.1} parent=5 // pred_check_branch
        %451 = sbr.rel (%p449) target = $region48
      $region47: #{tpu_custom_call.1} parent=5 // pred_region
        %s452 = ssub.s32 %s16, 2
        // Predicated region
        $region49: #{tpu_custom_call.1} parent=47 // pred_check
          %p453 = pneg %p129
        $region50: #{tpu_custom_call.1} parent=47 // pred_check_branch
          %455 = sbr.rel (%p453) target = $region52
        $region51: #{tpu_custom_call.1} parent=47 // pred_region
          %s456 = sand.u32 %s114, 1
          %s457 = scalar_lea.sflag [#allocation4], %s456
          %s458 = sand.u32 %s114, 1
          %s459 = smul.addr %s458, 8
          %s460 = scalar_lea.vmem [#allocation7], %s459
          %462 = dma.done %s457, 128
        $region52: #{tpu_custom_call.1} parent=47 // pred_fallthru
          _
      $region48: #{tpu_custom_call.1} parent=5 // pred_fallthru
        _
    $region6: #{tpu_custom_call.1} parent=1 // loop_footer
      %s20 = sadd.s32 1, %s16
    $region7: #{tpu_custom_call.1} parent=1 // loop_footer_branch
      %15 = sbr.rel target = $region3
    $region8: #{tpu_custom_call.1} parent=1 // loop_exit
      _
    %463 = vsyncpa [#allocation3], 1
    %s464 = scalar_lea.sflag [#allocation3], 1
    %465 = vsyncpa %s464, 1
    %466 = vsyncpa [#allocation6], 1
    %467 = vsyncpa [#allocation4], 1
    %s468 = scalar_lea.sflag [#allocation4], 1
    %469 = vsyncpa %s468, 1

</llo_original>
